<compile_context>
chip_gen: v7x
topology: tpu7x:2x2x1
jax: 0.10.0
libtpu: 0.0.40
codegen_flags: <defaults>
</compile_context>

<pallas_src>
import functools

import jax
import jax.numpy as jnp
from jax.experimental import pallas as pl
from jax.experimental.pallas import tpu as pltpu


def _round_up(n, m):
    return ((n + m - 1) // m) * m


def mlp_kernel(x_ref, w1_ref, b1_ref, w2_ref, b2_ref, out_ref):
    # Layer 1: cast x in-kernel, MXU matmul with f32 accumulation, f32 bias add,
    # then tanh in the compute dtype (bf16 EUP path on v6e/v7x).
    x = x_ref[...].astype(w1_ref.dtype)
    h_acc = jnp.dot(x, w1_ref[...], preferred_element_type=jnp.float32) + b1_ref[...]
    h = jnp.tanh(h_acc.astype(w2_ref.dtype))
    # Layer 2: lane-dense MXU matmul on the padded tile, then slice down to the
    # valid action columns before the store so HBM writeback is only the
    # logical output (masked store, ~32x fewer bytes than a 128-wide slab).
    y = jnp.dot(h, w2_ref[...], preferred_element_type=jnp.float32)
    n_out = out_ref.shape[1]
    out_ref[...] = (y[:, :n_out] + b2_ref[...]).astype(out_ref.dtype)


@functools.partial(jax.jit, static_argnames=("block_b", "compute_dtype"))
def mlp_forward(x, w1, b1, w2, b2, *, block_b=2048, compute_dtype=jnp.bfloat16):
    """x: (B, state), w1: (state, hidden), b1: (1, hidden),
    w2: (hidden, action), b2: (1, action) -> (B, action) in x.dtype."""
    B, state_num = x.shape
    hidden = w1.shape[1]
    action_num = w2.shape[1]

    hp = _round_up(hidden, 128)        # 100 -> 128 (lane-dense hidden)
    ap = _round_up(action_num, 128)    # padded N for the second MXU matmul only

    # Batch tile: multiple of 8 sublanes, capped by block_b. Prefer >= 2 grid
    # steps so the "parallel" batch axis can shard across two TensorCores.
    bb = min(block_b, _round_up(B, 8))
    if pl.cdiv(B, bb) == 1 and bb >= 16:
        bb = _round_up(pl.cdiv(bb, 2), 8)
    grid = (pl.cdiv(B, bb),)

    # Pad weights/biases once in the wrapper (tiny, resident across the grid).
    # Zero padding is exact: padded hidden cols -> tanh(0)=0 and the matching
    # W2 rows are zero, so valid output columns are unchanged.
    w1p = jnp.zeros((state_num, hp), compute_dtype).at[:, :hidden].set(
        w1.astype(compute_dtype))
    b1p = jnp.zeros((1, hp), jnp.float32).at[:, :hidden].set(
        b1.astype(jnp.float32))
    w2p = jnp.zeros((hp, ap), compute_dtype).at[:hidden, :action_num].set(
        w2.astype(compute_dtype))
    b2f = b2.astype(jnp.float32).reshape(1, action_num)

    cost = pl.CostEstimate(
        flops=2 * B * (state_num * hp + hp * ap),
        transcendentals=B * hp,
        bytes_accessed=(x.size * x.dtype.itemsize
                        + w1p.size * w1p.dtype.itemsize
                        + b1p.size * 4
                        + w2p.size * w2p.dtype.itemsize
                        + b2f.size * 4
                        + B * action_num * x.dtype.itemsize),
    )

    return pl.pallas_call(
        mlp_kernel,
        out_shape=jax.ShapeDtypeStruct((B, action_num), x.dtype),
        grid_spec=pl.GridSpec(
            grid=grid,
            in_specs=[
                # x streams over the batch axis, unpadded, native dtype.
                pl.BlockSpec((bb, state_num), lambda i: (i, 0)),
                # Weights / biases stay resident in VMEM across the grid.
                pl.BlockSpec((state_num, hp), lambda i: (0, 0)),
                pl.BlockSpec((1, hp), lambda i: (0, 0)),
                pl.BlockSpec((hp, ap), lambda i: (0, 0)),
                pl.BlockSpec((1, action_num), lambda i: (0, 0)),
            ],
            out_specs=pl.BlockSpec((bb, action_num), lambda i: (i, 0)),
        ),
        compiler_params=pltpu.CompilerParams(
            dimension_semantics=("parallel",),
        ),
        cost_estimate=cost,
    )(x, w1p, b1p, w2p, b2f)


def init_params(key, state_num, action_num, hidden=100):
    # Matches model._initialize_weights: weights ~ N(0, 1), biases = 0.
    k1, k2 = jax.random.split(key)
    w1 = jax.random.normal(k1, (state_num, hidden), dtype=jnp.float32)
    b1 = jnp.zeros((1, hidden), dtype=jnp.float32)
    w2 = jax.random.normal(k2, (hidden, action_num), dtype=jnp.float32)
    b2 = jnp.zeros((1, action_num), dtype=jnp.float32)
    return w1, b1, w2, b2


if __name__ == "__main__":
    key = jax.random.PRNGKey(0)
    state_num, action_num = 8, 4
    kx, kx2, kp = jax.random.split(key, 3)
    w1, b1, w2, b2 = init_params(kp, state_num, action_num)

    # --- Small primary test: batch=2 ---
    batch = 2
    x = jax.random.normal(kx, (batch, state_num), dtype=jnp.float32)
    ref = jnp.tanh(x @ w1 + b1) @ w2 + b2

    # 1) f32 compute path: must match the reference tightly.
    out_f32 = mlp_forward(x, w1, b1, w2, b2, compute_dtype=jnp.float32)
    jax.block_until_ready(out_f32)
    assert out_f32.shape == (batch, action_num)
    assert jnp.allclose(out_f32, ref, atol=1e-5, rtol=1e-5)

    # 2) bf16 compute path (default, MXU-optimized): looser tolerance.
    out_bf16 = mlp_forward(x, w1, b1, w2, b2)
    jax.block_until_ready(out_bf16)
    assert out_bf16.shape == (batch, action_num)
    assert jnp.allclose(out_bf16, ref, atol=0.5, rtol=5e-2)

    # --- Secondary test: ragged multi-step grid (B not a multiple of the tile) ---
    batch2 = 90
    x2 = jax.random.normal(kx2, (batch2, state_num), dtype=jnp.float32)
    ref2 = jnp.tanh(x2 @ w1 + b1) @ w2 + b2
    out2 = mlp_forward(x2, w1, b1, w2, b2)
    jax.block_until_ready(out2)
    assert out2.shape == (batch2, action_num)
    assert jnp.allclose(out2, ref2, atol=0.5, rtol=5e-2)

    print("KERNEL_OK")
</pallas_src>

<mosaic_0001>
module attributes {stable_mosaic.version = 11 : i64} {
  func.func @mlp_kernel(%arg0: i32, %arg1: memref<8x8xf32, #tpu.memory_space<vmem>>, %arg2: memref<8x128xf32, #tpu.memory_space<vmem>>, %arg3: memref<1x128xf32, #tpu.memory_space<vmem>>, %arg4: memref<128x128xf32, #tpu.memory_space<vmem>>, %arg5: memref<1x4xf32, #tpu.memory_space<vmem>>, %arg6: memref<8x4xf32, #tpu.memory_space<vmem>>) attributes {dimension_semantics = [#tpu.dimension_semantics<parallel>], iteration_bounds = array<i64: 1>, scalar_prefetch = 0 : i64, scratch_operands = 0 : i64, tpu.core_type = #tpu.core_type<tc>, window_params = [{transform_indices = @transform_0, window_bounds = array<i64: 8, 8>}, {pipeline_mode = #tpu.pipeline_mode<synchronous>, transform_indices = @transform_1, window_bounds = array<i64: 8, 128>}, {pipeline_mode = #tpu.pipeline_mode<synchronous>, transform_indices = @transform_2, window_bounds = array<i64: 1, 128>}, {pipeline_mode = #tpu.pipeline_mode<synchronous>, transform_indices = @transform_3, window_bounds = array<i64: 128, 128>}, {pipeline_mode = #tpu.pipeline_mode<synchronous>, transform_indices = @transform_4, window_bounds = array<i64: 1, 4>}, {transform_indices = @transform_5, window_bounds = array<i64: 8, 4>}]} {
    %c0 = arith.constant 0 : index
    %c0_0 = arith.constant 0 : index
    %0 = vector.load %arg1[%c0, %c0_0] : memref<8x8xf32, #tpu.memory_space<vmem>>, vector<8x8xf32>
    %c0_1 = arith.constant 0 : index
    %c0_2 = arith.constant 0 : index
    %1 = vector.load %arg2[%c0_1, %c0_2] : memref<8x128xf32, #tpu.memory_space<vmem>>, vector<8x128xf32>
    %cst = arith.constant dense<0.000000e+00> : vector<8x128xf32>
    %2 = tpu.matmul %0, %1, %cst {dimension_numbers = #tpu.dot_dimension_numbers<[1], [0], [0], [1], [0, 0, 1, 1], [], []>} : vector<8x8xf32>, vector<8x128xf32>, vector<8x128xf32> -> vector<8x128xf32>
    %c0_3 = arith.constant 0 : index
    %c0_4 = arith.constant 0 : index
    %3 = vector.load %arg3[%c0_3, %c0_4] : memref<1x128xf32, #tpu.memory_space<vmem>>, vector<1x128xf32>
    %4 = vector.broadcast %3 : vector<1x128xf32> to vector<8x128xf32>
    %5 = arith.addf %2, %4 : vector<8x128xf32>
    %6 = math.tanh %5 : vector<8x128xf32>
    %c0_5 = arith.constant 0 : index
    %c0_6 = arith.constant 0 : index
    %7 = vector.load %arg4[%c0_5, %c0_6] : memref<128x128xf32, #tpu.memory_space<vmem>>, vector<128x128xf32>
    %cst_7 = arith.constant dense<0.000000e+00> : vector<8x128xf32>
    %8 = tpu.matmul %6, %7, %cst_7 {dimension_numbers = #tpu.dot_dimension_numbers<[1], [0], [0], [1], [0, 0, 1, 1], [], []>} : vector<8x128xf32>, vector<128x128xf32>, vector<8x128xf32> -> vector<8x128xf32>
    %9 = vector.extract_strided_slice %8 {offsets = [0, 0], sizes = [8, 4], strides = [1, 1]} : vector<8x128xf32> to vector<8x4xf32>
    %c0_8 = arith.constant 0 : index
    %c0_9 = arith.constant 0 : index
    %10 = vector.load %arg5[%c0_8, %c0_9] : memref<1x4xf32, #tpu.memory_space<vmem>>, vector<1x4xf32>
    %11 = vector.broadcast %10 : vector<1x4xf32> to vector<8x4xf32>
    %12 = arith.addf %9, %11 : vector<8x4xf32>
    %c0_10 = arith.constant 0 : index
    %c0_11 = arith.constant 0 : index
    %13 = vector.load %arg6[%c0_10, %c0_11] : memref<8x4xf32, #tpu.memory_space<vmem>>, vector<8x4xf32>
    tpu.vector_store %arg6[%c0_10, %c0_11], %12 {strides = array<i32>} : memref<8x4xf32, #tpu.memory_space<vmem>>, vector<8x4xf32>,
    return
  }
  func.func @transform_0(%arg0: i32) -> (i32, i32) {
    %c0_i32 = arith.constant 0 : i32
    %c0_i32_0 = arith.constant 0 : i32
    return %arg0, %c0_i32 : i32, i32
  }
  func.func @transform_1(%arg0: i32) -> (i32, i32) {
    %c0_i32 = arith.constant 0 : i32
    %c0_i32_0 = arith.constant 0 : i32
    %c0_i32_1 = arith.constant 0 : i32
    return %c0_i32, %c0_i32_0 : i32, i32
  }
  func.func @transform_2(%arg0: i32) -> (i32, i32) {
    %c0_i32 = arith.constant 0 : i32
    %c0_i32_0 = arith.constant 0 : i32
    %c0_i32_1 = arith.constant 0 : i32
    return %c0_i32, %c0_i32_0 : i32, i32
  }
  func.func @transform_3(%arg0: i32) -> (i32, i32) {
    %c0_i32 = arith.constant 0 : i32
    %c0_i32_0 = arith.constant 0 : i32
    %c0_i32_1 = arith.constant 0 : i32
    return %c0_i32, %c0_i32_0 : i32, i32
  }
  func.func @transform_4(%arg0: i32) -> (i32, i32) {
    %c0_i32 = arith.constant 0 : i32
    %c0_i32_0 = arith.constant 0 : i32
    %c0_i32_1 = arith.constant 0 : i32
    return %c0_i32, %c0_i32_0 : i32, i32
  }
  func.func @transform_5(%arg0: i32) -> (i32, i32) {
    %c0_i32 = arith.constant 0 : i32
    %c0_i32_0 = arith.constant 0 : i32
    return %arg0, %c0_i32 : i32, i32
  }
}

</mosaic_0001>

<llo_original>
// kernel: mlp_forward.1
$region0: #{mlp_forward.1}
  #allocation0 [shape = 'u32[]', space=smem, size = 0x4, offset = 0x4, fixed_abs, tag = 'smem constant byte address 0x4 - core index']
  #allocation1 [shape = 'u32[144,128]{1,0:T(1,128)}', space=vmem, size = 0x12000, scoped, tag = 'internal scratch']
  %s0 = inlined_call_operand.vmem [shape: f32[2,8], index: 0, kind: input, shape index: {}]
  %s1 = inlined_call_operand.vmem [shape: f32[8,128], index: 1, kind: input, shape index: {}]
  %s2 = inlined_call_operand.vmem [shape: f32[1,128], index: 2, kind: input, shape index: {}]
  %s3 = inlined_call_operand.vmem [shape: f32[128,128], index: 3, kind: input, shape index: {}]
  %s4 = inlined_call_operand.vmem [shape: f32[1,4], index: 4, kind: input, shape index: {}]
  %s5 = inlined_call_operand.hbm [shape: f32[2,4], index: 5, kind: output, shape index: {}]
  %s6 = sld [smem:[#allocation0]]
  $region30: #{mlp_forward.1} parent=0
    _
  %s8 = ssub.s32 1, %s6
  %s9 = scalar_select 0, %s8, %s6
  $region1: #{mlp_forward.1} parent=0
    #allocation2 [shape = 'u8[4096]{0}', space=vmem, size = 0x1000, scoped, tag = 'output window, operand 0, single buffered']
    #allocation3 [shape = 's32[1]{0}', space=sflag, size = 0x4, scoped, tag = 'scoped memory for mlp_forward.1']
    %10 = vsyncpa [#allocation3], 0
    // Predicated region
    $region2: #{mlp_forward.1} parent=1 // pred_check
      _
    $region3: #{mlp_forward.1} parent=1 // pred_check_branch
      %12 = sbr.rel (0) target = $region5
    $region4: #{mlp_forward.1} parent=1 // pred_region
      _
    $region5: #{mlp_forward.1} parent=1 // pred_fallthru
      _
    // Predicated region
    $region6: #{mlp_forward.1} parent=1 // pred_check
      _
    $region7: #{mlp_forward.1} parent=1 // pred_check_branch
      %14 = sbr.rel (0) target = $region9
    $region8: #{mlp_forward.1} parent=1 // pred_region
      _
    $region9: #{mlp_forward.1} parent=1 // pred_fallthru
      _
    // Predicated region
    $region10: #{mlp_forward.1} parent=1 // pred_check
      _
    $region11: #{mlp_forward.1} parent=1 // pred_check_branch
      %16 = sbr.rel (0) target = $region13
    $region12: #{mlp_forward.1} parent=1 // pred_region
      _
    $region13: #{mlp_forward.1} parent=1 // pred_fallthru
      _
    // Predicated region
    $region14: #{mlp_forward.1} parent=1 // pred_check
      _
    $region15: #{mlp_forward.1} parent=1 // pred_check_branch
      %18 = sbr.rel (0) target = $region17
    $region16: #{mlp_forward.1} parent=1 // pred_region
      _
    $region17: #{mlp_forward.1} parent=1 // pred_fallthru
      _
    // Predicated region
    $region18: #{mlp_forward.1} parent=1 // pred_check
      _
    $region19: #{mlp_forward.1} parent=1 // pred_check_branch
      %20 = sbr.rel (0) target = $region21
    $region20: #{mlp_forward.1} parent=1 // pred_region
      _
    $region21: #{mlp_forward.1} parent=1 // pred_fallthru
      _
    %v21 = vld [vmem:[%s0] sm:$0xff]
    %v22 = vld [vmem:[%s1] sm:$0xff]
    %v23 = vld [vmem:[%s2] sm:$0x1]
    %v25 = vlaneseq
    %v26 = vshrl.u32 %v25, 7
    %v27 = vsub.s32 0, %v26
    %v28 = vrot.slane %v23, %v27
    %vm30 = vcmask 64512
    %v32 = vsel %vm30, %v21, 0
    %34 = vmatprep.subr.mxu0 0.0
    %35 = vmatpush1.msra.mxu0 %v22
    %36 = vmatprep.subr.mxu0 0.0
    %37 = vmatpush1.msra.mxu0 0.0
    %38 = vmatprep.subr.mxu0 0.0
    %39 = vmatpush1.msra.mxu0 0.0
    %40 = vmatprep.subr.mxu0 0.0
    %41 = vmatpush1.msra.mxu0 0.0
    %42 = vmatprep.subr.mxu0 0.0
    %43 = vmatpush1.msra.mxu0 0.0
    %44 = vmatprep.subr.mxu0 0.0
    %45 = vmatpush1.msra.mxu0 0.0
    %46 = vmatprep.subr.mxu0 0.0
    %47 = vmatpush1.msra.mxu0 0.0
    %48 = vmatprep.subr.mxu0 0.0
    %49 = vmatpush1.msra.mxu0 0.0
    %50 = vmatprep.subr.mxu0 0.0
    %51 = vmatpush1.msra.mxu0 0.0
    %52 = vmatprep.subr.mxu0 0.0
    %53 = vmatpush1.msra.mxu0 0.0
    %54 = vmatprep.subr.mxu0 0.0
    %55 = vmatpush1.msra.mxu0 0.0
    %56 = vmatprep.subr.mxu0 0.0
    %57 = vmatpush1.msra.mxu0 0.0
    %58 = vmatprep.subr.mxu0 0.0
    %59 = vmatpush1.msra.mxu0 0.0
    %60 = vmatprep.subr.mxu0 0.0
    %61 = vmatpush1.msra.mxu0 0.0
    %62 = vmatprep.subr.mxu0 0.0
    %63 = vmatpush1.msra.mxu0 0.0
    %64 = vmatprep.subr.mxu0 0.0
    %65 = vmatpush1.msra.mxu0 0.0
    %66 = vmatprep.subr.mxu0 0.0
    %67 = vmatpush1.msra.mxu0 0.0
    %68 = vmatprep.subr.mxu0 0.0
    %69 = vmatpush1.msra.mxu0 0.0
    %70 = vmatprep.subr.mxu0 0.0
    %71 = vmatpush1.msra.mxu0 0.0
    %72 = vmatprep.subr.mxu0 0.0
    %73 = vmatpush1.msra.mxu0 0.0
    %74 = vmatprep.subr.mxu0 0.0
    %75 = vmatpush1.msra.mxu0 0.0
    %76 = vmatprep.subr.mxu0 0.0
    %77 = vmatpush1.msra.mxu0 0.0
    %78 = vmatprep.subr.mxu0 0.0
    %79 = vmatpush1.msra.mxu0 0.0
    %80 = vmatprep.subr.mxu0 0.0
    %81 = vmatpush1.msra.mxu0 0.0
    %82 = vmatprep.subr.mxu0 0.0
    %83 = vmatpush1.msra.mxu0 0.0
    %84 = vmatprep.subr.mxu0 0.0
    %85 = vmatpush1.msra.mxu0 0.0
    %86 = vmatprep.subr.mxu0 0.0
    %87 = vmatpush1.msra.mxu0 0.0
    %88 = vmatprep.subr.mxu0 0.0
    %89 = vmatpush1.msra.mxu0 0.0
    %90 = vmatprep.subr.mxu0 0.0
    %91 = vmatpush1.msra.mxu0 0.0
    %92 = vmatprep.subr.mxu0 0.0
    %93 = vmatpush1.msra.mxu0 0.0
    %94 = vmatprep.subr.mxu0 0.0
    %95 = vmatpush1.msra.mxu0 0.0
    %96 = vmatprep.subr.mxu0 0.0
    %97 = vmatpush1.msra.mxu0 0.0
    %98 = vmatprep.mubr.f32.mxu0 0.0
    %99 = vmatmul.mubr.f32.gmra.mrb[0].mxu0 %v32
    %v100 = vpop.f32.mrb[0].mxu0
    %v101 = vadd.f32 %v28, %v100
    %v102 = vpop.f32.mrb[0].mxu0
    %103 = vdwg.mxu0
    %v104 = vtanh.pop %v101
    %v105 = vld [vmem:[%s3] sm:$0xff]
    %v106 = vld [vmem:[%s3 + $0x8] sm:$0xff]
    %v107 = vld [vmem:[%s3 + $0x10] sm:$0xff]
    %v108 = vld [vmem:[%s3 + $0x18] sm:$0xff]
    %v109 = vld [vmem:[%s3 + $0x20] sm:$0xff]
    %v110 = vld [vmem:[%s3 + $0x28] sm:$0xff]
    %v111 = vld [vmem:[%s3 + $0x30] sm:$0xff]
    %v112 = vld [vmem:[%s3 + $0x38] sm:$0xff]
    %v113 = vld [vmem:[%s3 + $0x40] sm:$0xff]
    %v114 = vld [vmem:[%s3 + $0x48] sm:$0xff]
    %v115 = vld [vmem:[%s3 + $0x50] sm:$0xff]
    %v116 = vld [vmem:[%s3 + $0x58] sm:$0xff]
    %v117 = vld [vmem:[%s3 + $0x60] sm:$0xff]
    %v118 = vld [vmem:[%s3 + $0x68] sm:$0xff]
    %v119 = vld [vmem:[%s3 + $0x70] sm:$0xff]
    %v120 = vld [vmem:[%s3 + $0x78] sm:$0xff]
    %121 = vmatprep.subr.mxu0 0.0
    %122 = vmatpush1.msra.mxu0 %v105
    %123 = vmatprep.subr.mxu0 0.0
    %124 = vmatpush1.msra.mxu0 %v106
    %125 = vmatprep.subr.mxu0 0.0
    %126 = vmatpush1.msra.mxu0 %v107
    %127 = vmatprep.subr.mxu0 0.0
    %128 = vmatpush1.msra.mxu0 %v108
    %129 = vmatprep.subr.mxu0 0.0
    %130 = vmatpush1.msra.mxu0 %v109
    %131 = vmatprep.subr.mxu0 0.0
    %132 = vmatpush1.msra.mxu0 %v110
    %133 = vmatprep.subr.mxu0 0.0
    %134 = vmatpush1.msra.mxu0 %v111
    %135 = vmatprep.subr.mxu0 0.0
    %136 = vmatpush1.msra.mxu0 %v112
    %137 = vmatprep.subr.mxu0 0.0
    %138 = vmatpush1.msra.mxu0 %v113
    %139 = vmatprep.subr.mxu0 0.0
    %140 = vmatpush1.msra.mxu0 %v114
    %141 = vmatprep.subr.mxu0 0.0
    %142 = vmatpush1.msra.mxu0 %v115
    %143 = vmatprep.subr.mxu0 0.0
    %144 = vmatpush1.msra.mxu0 %v116
    %145 = vmatprep.subr.mxu0 0.0
    %146 = vmatpush1.msra.mxu0 %v117
    %147 = vmatprep.subr.mxu0 0.0
    %148 = vmatpush1.msra.mxu0 %v118
    %149 = vmatprep.subr.mxu0 0.0
    %150 = vmatpush1.msra.mxu0 %v119
    %151 = vmatprep.subr.mxu0 0.0
    %152 = vmatpush1.msra.mxu0 %v120
    %153 = vmatprep.subr.mxu0 0.0
    %154 = vmatpush1.msra.mxu0 0.0
    %155 = vmatprep.subr.mxu0 0.0
    %156 = vmatpush1.msra.mxu0 0.0
    %157 = vmatprep.subr.mxu0 0.0
    %158 = vmatpush1.msra.mxu0 0.0
    %159 = vmatprep.subr.mxu0 0.0
    %160 = vmatpush1.msra.mxu0 0.0
    %161 = vmatprep.subr.mxu0 0.0
    %162 = vmatpush1.msra.mxu0 0.0
    %163 = vmatprep.subr.mxu0 0.0
    %164 = vmatpush1.msra.mxu0 0.0
    %165 = vmatprep.subr.mxu0 0.0
    %166 = vmatpush1.msra.mxu0 0.0
    %167 = vmatprep.subr.mxu0 0.0
    %168 = vmatpush1.msra.mxu0 0.0
    %169 = vmatprep.subr.mxu0 0.0
    %170 = vmatpush1.msra.mxu0 0.0
    %171 = vmatprep.subr.mxu0 0.0
    %172 = vmatpush1.msra.mxu0 0.0
    %173 = vmatprep.subr.mxu0 0.0
    %174 = vmatpush1.msra.mxu0 0.0
    %175 = vmatprep.subr.mxu0 0.0
    %176 = vmatpush1.msra.mxu0 0.0
    %177 = vmatprep.subr.mxu0 0.0
    %178 = vmatpush1.msra.mxu0 0.0
    %179 = vmatprep.subr.mxu0 0.0
    %180 = vmatpush1.msra.mxu0 0.0
    %181 = vmatprep.subr.mxu0 0.0
    %182 = vmatpush1.msra.mxu0 0.0
    %183 = vmatprep.subr.mxu0 0.0
    %184 = vmatpush1.msra.mxu0 0.0
    %185 = vmatprep.mubr.f32.mxu0 0.0
    %186 = vmatmul.mubr.f32.gmra.mrb[0].mxu0 %v104
    %v187 = vpop.f32.mrb[0].mxu0
    %v188 = vadd.f32 0.0, %v187
    %v189 = vpop.f32.mrb[0].mxu0
    %190 = vdwg.mxu0
    %v191 = vld [vmem:[%s4] sm:$0x1]
    %v193 = vlaneseq
    %v194 = vshrl.u32 %v193, 7
    %v195 = vsub.s32 0, %v194
    %v196 = vrot.slane %v191, %v195
    %v198 = vadd.f32 %v188, %v196
    %vm199 = vcmask 31744
    %200 = vst.msk [vmem:[#allocation2] sm:$0xff] %vm199, %v198
    // Predicated region
    $region22: #{mlp_forward.1} parent=1 // pred_check
      _
    $region23: #{mlp_forward.1} parent=1 // pred_check_branch
      %202 = sbr.rel (0) target = $region25
    $region24: #{mlp_forward.1} parent=1 // pred_region
      %s204 = ssub.s32 128, 32
      %205 = vsyncadd [#allocation3], %s204
      %s206 = sshll.u32 [#allocation2], 4
      %s207 = int_to_ptr.vmem [resolvable:$true] %s206
      %212 = dma.vmem_to_hbm [thread:$0]  %s207, 32, %s5, [#allocation3], 32, 32, 2
    $region25: #{mlp_forward.1} parent=1 // pred_fallthru
      _
    // Predicated region
    $region26: #{mlp_forward.1} parent=1 // pred_check
      _
    $region27: #{mlp_forward.1} parent=1 // pred_check_branch
      %214 = sbr.rel (0) target = $region29
    $region28: #{mlp_forward.1} parent=1 // pred_region
      %215 = dma.done [#allocation3], 128
    $region29: #{mlp_forward.1} parent=1 // pred_fallthru
      _
    %216 = vsyncpa [#allocation3], 1

</llo_original>
